<compile_context>
chip_gen: v7x
topology: tpu7x:2x2x1
jax: 0.10.0
libtpu: 0.0.40
codegen_flags: <defaults>
</compile_context>

<pallas_src>
import jax
import jax.numpy as jnp
from jax.experimental import pallas as pl
from jax.experimental.pallas import tpu as pltpu


def head_kernel(x_ref, w_ref, b_ref, o_ref):
    """Global-avg-pool + linear for one batch tile.

    x_ref: (TN, HW, C)  feature tile, channel-last (C on lanes, HW on sublanes)
    w_ref: (1, C)       fc weight, lane-major (no width-1 MXU GEMV)
    b_ref: (1,)         fc bias (SMEM scalar)
    o_ref: (TN, 1)      logits
    """
    # Upcast to f32 in-kernel (bf16 inputs halve HBM traffic; f32 accumulation
    # keeps accuracy and lowers cleanly on v5e which has no bf16 VPU).
    x = x_ref[...].astype(jnp.float32)                      # (TN, HW, C)
    # AdaptiveAvgPool2d(1) + Flatten: mean over spatial -> cheap sublane reduce.
    pooled = jnp.mean(x, axis=1)                            # (TN, C)
    w = w_ref[...].astype(jnp.float32)                      # (1, C)
    # Linear(C, 1) as VPU multiply + lane reduce (avoids a degenerate MXU matmul
    # and the ~640 KB padded (C, 1) weight tile).
    logits = jnp.sum(pooled * w, axis=-1, keepdims=True) + b_ref[0]
    # The 5 dropout branches are identity at inference; their average == logits.
    o_ref[...] = logits.astype(o_ref.dtype)


def model_head(feats_nchw, fc_w, fc_b, *, block_n=None):
    """feats_nchw: (N, C, H, W) backbone features (f32 or bf16);
    fc_w: (1, C) torch-layout fc weight; fc_b: (1,) fc bias."""
    N, C, H, W = feats_nchw.shape
    HW = H * W

    # Channel-last layout: C (multiple of 128) on the lane axis, HW on sublanes.
    # Loads are fully lane-dense and the pool is a sublane reduce. A real
    # backbone would ideally emit NHWC and skip this transpose entirely.
    x = jnp.transpose(feats_nchw.reshape(N, C, HW), (0, 2, 1))   # (N, HW, C), dtype preserved
    w = jnp.asarray(fc_w, jnp.float32).reshape(1, C)             # lane-major weight
    b = jnp.asarray(fc_b, jnp.float32).reshape(1)                # scalar bias -> SMEM

    itemsize = jnp.dtype(x.dtype).itemsize
    if block_n is None:
        # ~2 MiB per input block: double-buffers comfortably even against the
        # v7x 32 MiB scoped-VMEM default while keeping per-step DMAs large.
        block_n = max(1, (2 * 1024 * 1024) // (HW * C * itemsize))
    if block_n >= N:
        block_n = N
    else:
        block_n = max(8, (block_n // 8) * 8)   # keep (TN, 1) out-block sublane-aligned
    grid_n = pl.cdiv(N, block_n)

    # Advisory cost so XLA can overlap this tiny, HBM-bound head with
    # surrounding backbone ops (matters most on v7x).
    cost = pl.CostEstimate(
        flops=2 * N * C * (HW + 1),
        transcendentals=0,
        bytes_accessed=N * HW * C * itemsize + C * 4 + 4 + N * 4,
    )

    return pl.pallas_call(
        head_kernel,
        out_shape=jax.ShapeDtypeStruct((N, 1), jnp.float32),
        grid_spec=pl.GridSpec(
            grid=(grid_n,),
            in_specs=[
                pl.BlockSpec((block_n, HW, C), lambda i: (i, 0, 0)),
                pl.BlockSpec((1, C), lambda i: (0, 0)),
                pl.BlockSpec(memory_space=pltpu.MemorySpace.SMEM),  # bias scalar
            ],
            out_specs=pl.BlockSpec((block_n, 1), lambda i: (i, 0)),
        ),
        compiler_params=pltpu.CompilerParams(
            dimension_semantics=("parallel",),   # batch tiles shard across TCs on v7x
        ),
        cost_estimate=cost,
    )(x, w, b)


if __name__ == "__main__":
    # efficientnet-b0 -> 1280 feature channels; small spatial / batch for the demo.
    N, C, H, W = 2, 1280, 8, 8

    key = jax.random.PRNGKey(0)
    k_feat, k_w, k_b = jax.random.split(key, 3)

    feats = jax.random.normal(k_feat, (N, C, H, W), dtype=jnp.float32)
    fc_w = jax.random.normal(k_w, (1, C), dtype=jnp.float32) * 0.02   # nn.Linear(1280, 1) weight
    fc_b = jax.random.normal(k_b, (1,), dtype=jnp.float32) * 0.02     # nn.Linear bias

    # f32 feature path.
    out = jax.block_until_ready(model_head(feats, fc_w, fc_b))
    pooled_ref = jnp.mean(feats.reshape(N, C, H * W), axis=-1)
    ref = pooled_ref @ fc_w.T + fc_b[None, :]
    assert out.shape == (N, 1)
    assert jnp.allclose(out, ref, atol=1e-5, rtol=1e-5), (out, ref)

    # bf16 feature path: half the HBM traffic, f32 accumulation inside the kernel.
    feats_bf16 = feats.astype(jnp.bfloat16)
    out_bf16 = jax.block_until_ready(model_head(feats_bf16, fc_w, fc_b))
    pooled_bf16 = jnp.mean(feats_bf16.astype(jnp.float32).reshape(N, C, H * W), axis=-1)
    ref_bf16 = pooled_bf16 @ fc_w.T + fc_b[None, :]
    assert jnp.allclose(out_bf16, ref_bf16, atol=1e-4, rtol=1e-4), (out_bf16, ref_bf16)

    print("KERNEL_OK")
</pallas_src>

<mosaic_0001>
module attributes {stable_mosaic.version = 11 : i64} {
  func.func @head_kernel(%arg0: i32, %arg1: memref<2x64x1280xf32, #tpu.memory_space<vmem>>, %arg2: memref<1x1280xf32, #tpu.memory_space<vmem>>, %arg3: memref<1xf32, #tpu.memory_space<smem>>, %arg4: memref<2x1xf32, #tpu.memory_space<vmem>>) attributes {dimension_semantics = [#tpu.dimension_semantics<parallel>], iteration_bounds = array<i64: 1>, scalar_prefetch = 0 : i64, scratch_operands = 0 : i64, tpu.core_type = #tpu.core_type<tc>, window_params = [{transform_indices = @transform_0, window_bounds = array<i64: 2, 64, 1280>}, {pipeline_mode = #tpu.pipeline_mode<synchronous>, transform_indices = @transform_1, window_bounds = array<i64: 1, 1280>}, {transform_indices = @transform_2, window_bounds = array<i64: 1>}, {transform_indices = @transform_3, window_bounds = array<i64: 2, 1>}]} {
    %c0 = arith.constant 0 : index
    %c0_0 = arith.constant 0 : index
    %c0_1 = arith.constant 0 : index
    %0 = vector.load %arg1[%c0, %c0_0, %c0_1] : memref<2x64x1280xf32, #tpu.memory_space<vmem>>, vector<2x64x1280xf32>
    %cst = arith.constant dense<0.000000e+00> : vector<2x1280xf32>
    %1 = vector.multi_reduction <add>, %0, %cst [1] : vector<2x64x1280xf32> to vector<2x1280xf32>
    %cst_2 = arith.constant 6.400000e+01 : f32
    %2 = vector.broadcast %cst_2 : f32 to vector<2x1280xf32>
    %3 = arith.divf %1, %2 : vector<2x1280xf32>
    %c0_3 = arith.constant 0 : index
    %c0_4 = arith.constant 0 : index
    %4 = vector.load %arg2[%c0_3, %c0_4] : memref<1x1280xf32, #tpu.memory_space<vmem>>, vector<1x1280xf32>
    %5 = vector.broadcast %4 : vector<1x1280xf32> to vector<2x1280xf32>
    %6 = arith.mulf %3, %5 : vector<2x1280xf32>
    %cst_5 = arith.constant dense<0.000000e+00> : vector<2xf32>
    %7 = vector.multi_reduction <add>, %6, %cst_5 [1] : vector<2x1280xf32> to vector<2xf32>
    %8 = vector.shape_cast %7 : vector<2xf32> to vector<2x1xf32>
    %c0_6 = arith.constant 0 : index
    %9 = memref.load %arg3[%c0_6] : memref<1xf32, #tpu.memory_space<smem>>
    %10 = vector.broadcast %9 : f32 to vector<2x1xf32>
    %11 = arith.addf %8, %10 : vector<2x1xf32>
    %c0_7 = arith.constant 0 : index
    %c0_8 = arith.constant 0 : index
    %12 = vector.load %arg4[%c0_7, %c0_8] : memref<2x1xf32, #tpu.memory_space<vmem>>, vector<2x1xf32>
    tpu.vector_store %arg4[%c0_7, %c0_8], %11 {strides = array<i32>} : memref<2x1xf32, #tpu.memory_space<vmem>>, vector<2x1xf32>,
    return
  }
  func.func @transform_0(%arg0: i32) -> (i32, i32, i32) {
    %c0_i32 = arith.constant 0 : i32
    %c0_i32_0 = arith.constant 0 : i32
    %c0_i32_1 = arith.constant 0 : i32
    return %arg0, %c0_i32, %c0_i32_0 : i32, i32, i32
  }
  func.func @transform_1(%arg0: i32) -> (i32, i32) {
    %c0_i32 = arith.constant 0 : i32
    %c0_i32_0 = arith.constant 0 : i32
    %c0_i32_1 = arith.constant 0 : i32
    return %c0_i32, %c0_i32_0 : i32, i32
  }
  func.func @transform_2(%arg0: i32) -> i32 {
    %c0_i32 = arith.constant 0 : i32
    %c0_i32_0 = arith.constant 0 : i32
    return %c0_i32 : i32
  }
  func.func @transform_3(%arg0: i32) -> (i32, i32) {
    %c0_i32 = arith.constant 0 : i32
    %c0_i32_0 = arith.constant 0 : i32
    return %arg0, %c0_i32 : i32, i32
  }
}

</mosaic_0001>

<llo_original>
// kernel: tpu_custom_call.1
$region0: #{tpu_custom_call.1}
  #allocation0 [shape = 'u32[]', space=smem, size = 0x4, offset = 0x4, fixed_abs, tag = 'smem constant byte address 0x4 - core index']
  #allocation1 [shape = 'u32[144,128]{1,0:T(1,128)}', space=vmem, size = 0x12000, scoped, tag = 'internal scratch']
  #allocation2 [shape = 'f32[1]{0:T(128)S(6)}', space=smem, size = 0x200, scoped, tag = 'scoped memory for tpu_custom_call.1']
  %s0 = inlined_call_operand.hbm [shape: f32[2,64,1280], index: 0, kind: input, shape index: {}]
  %s1 = inlined_call_operand.hbm [shape: f32[1,1280], index: 1, kind: input, shape index: {}]
  %s2 = inlined_call_operand.<no memory space> [shape: f32[1], index: 2, kind: input, shape index: {}]
  %s3 = inlined_call_operand.vmem [shape: f32[2,1], index: 3, kind: output, shape index: {}]
  %s4 = sld [smem:[#allocation0]]
  $region30: #{tpu_custom_call.1} parent=0
    _
  %s6 = ssub.s32 1, %s4
  %s7 = scalar_select 0, %s6, %s4
  %8 = sst [smem:[#allocation2]] %s2
  $region1: #{tpu_custom_call.1} parent=0
    #allocation3 [shape = 'u8[655360]{0}', space=vmem, size = 0xa0000, scoped, tag = 'input window, operand 0, single buffered']
    #allocation4 [shape = 's32[1]{0}', space=sflag, size = 0x4, scoped, tag = 'scoped memory for tpu_custom_call.1']
    #allocation5 [shape = 'u8[5120]{0}', space=vmem, size = 0x1400, scoped, tag = 'input window, operand 1, single buffered']
    #allocation6 [shape = 's32[1]{0}', space=sflag, size = 0x4, scoped, tag = 'scoped memory for tpu_custom_call.1']
    %9 = vsyncpa [#allocation4], 0
    %10 = vsyncpa [#allocation6], 0
    // Predicated region
    $region2: #{tpu_custom_call.1} parent=1 // pred_check
      _
    $region3: #{tpu_custom_call.1} parent=1 // pred_check_branch
      %12 = sbr.rel (0) target = $region5
    $region4: #{tpu_custom_call.1} parent=1 // pred_region
      %s14 = ssub.s32 20480, 20480
      %15 = vsyncadd [#allocation4], %s14
      %s16 = sshll.u32 [#allocation3], 4
      %s17 = int_to_ptr.vmem [resolvable:$true] %s16
      %22 = dma.hbm_to_vmem [thread:$0]  %s0, 20480, %s17, [#allocation4], 1280, 1280, 80
    $region5: #{tpu_custom_call.1} parent=1 // pred_fallthru
      _
    // Predicated region
    $region6: #{tpu_custom_call.1} parent=1 // pred_check
      _
    $region7: #{tpu_custom_call.1} parent=1 // pred_check_branch
      %24 = sbr.rel (0) target = $region9
    $region8: #{tpu_custom_call.1} parent=1 // pred_region
      %s26 = ssub.s32 160, 160
      %27 = vsyncadd [#allocation6], %s26
      %s29 = sshll.u32 [#allocation5], 4
      %s30 = int_to_ptr.vmem [resolvable:$true] %s29
      %32 = dma.hbm_to_vmem [thread:$0]  %s1, 160, %s30, [#allocation6]
    $region9: #{tpu_custom_call.1} parent=1 // pred_fallthru
      _
    // Predicated region
    $region10: #{tpu_custom_call.1} parent=1 // pred_check
      _
    $region11: #{tpu_custom_call.1} parent=1 // pred_check_branch
      %34 = sbr.rel (0) target = $region13
    $region12: #{tpu_custom_call.1} parent=1 // pred_region
      _
    $region13: #{tpu_custom_call.1} parent=1 // pred_fallthru
      _
    // Predicated region
    $region14: #{tpu_custom_call.1} parent=1 // pred_check
      _
    $region15: #{tpu_custom_call.1} parent=1 // pred_check_branch
      %36 = sbr.rel (0) target = $region17
    $region16: #{tpu_custom_call.1} parent=1 // pred_region
      %37 = dma.done [#allocation4], 20480
    $region17: #{tpu_custom_call.1} parent=1 // pred_fallthru
      _
    // Predicated region
    $region18: #{tpu_custom_call.1} parent=1 // pred_check
      _
    $region19: #{tpu_custom_call.1} parent=1 // pred_check_branch
      %39 = sbr.rel (0) target = $region21
    $region20: #{tpu_custom_call.1} parent=1 // pred_region
      %40 = dma.done [#allocation6], 160
    $region21: #{tpu_custom_call.1} parent=1 // pred_fallthru
      _
    %v41 = vld [vmem:[#allocation3] sm:$0xff]
    %v42 = vld [vmem:[#allocation3 + $0x8] sm:$0xff]
    %v43 = vld [vmem:[#allocation3 + $0x10] sm:$0xff]
    %v44 = vld [vmem:[#allocation3 + $0x18] sm:$0xff]
    %v45 = vld [vmem:[#allocation3 + $0x20] sm:$0xff]
    %v46 = vld [vmem:[#allocation3 + $0x28] sm:$0xff]
    %v47 = vld [vmem:[#allocation3 + $0x30] sm:$0xff]
    %v48 = vld [vmem:[#allocation3 + $0x38] sm:$0xff]
    %v49 = vld [vmem:[#allocation3 + $0x40] sm:$0xff]
    %v50 = vld [vmem:[#allocation3 + $0x48] sm:$0xff]
    %v51 = vld [vmem:[#allocation3 + $0x50] sm:$0xff]
    %v52 = vld [vmem:[#allocation3 + $0x58] sm:$0xff]
    %v53 = vld [vmem:[#allocation3 + $0x60] sm:$0xff]
    %v54 = vld [vmem:[#allocation3 + $0x68] sm:$0xff]
    %v55 = vld [vmem:[#allocation3 + $0x70] sm:$0xff]
    %v56 = vld [vmem:[#allocation3 + $0x78] sm:$0xff]
    %v57 = vld [vmem:[#allocation3 + $0x80] sm:$0xff]
    %v58 = vld [vmem:[#allocation3 + $0x88] sm:$0xff]
    %v59 = vld [vmem:[#allocation3 + $0x90] sm:$0xff]
    %v60 = vld [vmem:[#allocation3 + $0x98] sm:$0xff]
    %v61 = vld [vmem:[#allocation3 + $0xa0] sm:$0xff]
    %v62 = vld [vmem:[#allocation3 + $0xa8] sm:$0xff]
    %v63 = vld [vmem:[#allocation3 + $0xb0] sm:$0xff]
    %v64 = vld [vmem:[#allocation3 + $0xb8] sm:$0xff]
    %v65 = vld [vmem:[#allocation3 + $0xc0] sm:$0xff]
    %v66 = vld [vmem:[#allocation3 + $0xc8] sm:$0xff]
    %v67 = vld [vmem:[#allocation3 + $0xd0] sm:$0xff]
    %v68 = vld [vmem:[#allocation3 + $0xd8] sm:$0xff]
    %v69 = vld [vmem:[#allocation3 + $0xe0] sm:$0xff]
    %v70 = vld [vmem:[#allocation3 + $0xe8] sm:$0xff]
    %v71 = vld [vmem:[#allocation3 + $0xf0] sm:$0xff]
    %v72 = vld [vmem:[#allocation3 + $0xf8] sm:$0xff]
    %v73 = vld [vmem:[#allocation3 + $0x100] sm:$0xff]
    %v74 = vld [vmem:[#allocation3 + $0x108] sm:$0xff]
    %v75 = vld [vmem:[#allocation3 + $0x110] sm:$0xff]
    %v76 = vld [vmem:[#allocation3 + $0x118] sm:$0xff]
    %v77 = vld [vmem:[#allocation3 + $0x120] sm:$0xff]
    %v78 = vld [vmem:[#allocation3 + $0x128] sm:$0xff]
    %v79 = vld [vmem:[#allocation3 + $0x130] sm:$0xff]
    %v80 = vld [vmem:[#allocation3 + $0x138] sm:$0xff]
    %v81 = vld [vmem:[#allocation3 + $0x140] sm:$0xff]
    %v82 = vld [vmem:[#allocation3 + $0x148] sm:$0xff]
    %v83 = vld [vmem:[#allocation3 + $0x150] sm:$0xff]
    %v84 = vld [vmem:[#allocation3 + $0x158] sm:$0xff]
    %v85 = vld [vmem:[#allocation3 + $0x160] sm:$0xff]
    %v86 = vld [vmem:[#allocation3 + $0x168] sm:$0xff]
    %v87 = vld [vmem:[#allocation3 + $0x170] sm:$0xff]
    %v88 = vld [vmem:[#allocation3 + $0x178] sm:$0xff]
    %v89 = vld [vmem:[#allocation3 + $0x180] sm:$0xff]
    %v90 = vld [vmem:[#allocation3 + $0x188] sm:$0xff]
    %v91 = vld [vmem:[#allocation3 + $0x190] sm:$0xff]
    %v92 = vld [vmem:[#allocation3 + $0x198] sm:$0xff]
    %v93 = vld [vmem:[#allocation3 + $0x1a0] sm:$0xff]
    %v94 = vld [vmem:[#allocation3 + $0x1a8] sm:$0xff]
    %v95 = vld [vmem:[#allocation3 + $0x1b0] sm:$0xff]
    %v96 = vld [vmem:[#allocation3 + $0x1b8] sm:$0xff]
    %v97 = vld [vmem:[#allocation3 + $0x1c0] sm:$0xff]
    %v98 = vld [vmem:[#allocation3 + $0x1c8] sm:$0xff]
    %v99 = vld [vmem:[#allocation3 + $0x1d0] sm:$0xff]
    %v100 = vld [vmem:[#allocation3 + $0x1d8] sm:$0xff]
    %v101 = vld [vmem:[#allocation3 + $0x1e0] sm:$0xff]
    %v102 = vld [vmem:[#allocation3 + $0x1e8] sm:$0xff]
    %v103 = vld [vmem:[#allocation3 + $0x1f0] sm:$0xff]
    %v104 = vld [vmem:[#allocation3 + $0x1f8] sm:$0xff]
    %v105 = vld [vmem:[#allocation3 + $0x200] sm:$0xff]
    %v106 = vld [vmem:[#allocation3 + $0x208] sm:$0xff]
    %v107 = vld [vmem:[#allocation3 + $0x210] sm:$0xff]
    %v108 = vld [vmem:[#allocation3 + $0x218] sm:$0xff]
    %v109 = vld [vmem:[#allocation3 + $0x220] sm:$0xff]
    %v110 = vld [vmem:[#allocation3 + $0x228] sm:$0xff]
    %v111 = vld [vmem:[#allocation3 + $0x230] sm:$0xff]
    %v112 = vld [vmem:[#allocation3 + $0x238] sm:$0xff]
    %v113 = vld [vmem:[#allocation3 + $0x240] sm:$0xff]
    %v114 = vld [vmem:[#allocation3 + $0x248] sm:$0xff]
    %v115 = vld [vmem:[#allocation3 + $0x250] sm:$0xff]
    %v116 = vld [vmem:[#allocation3 + $0x258] sm:$0xff]
    %v117 = vld [vmem:[#allocation3 + $0x260] sm:$0xff]
    %v118 = vld [vmem:[#allocation3 + $0x268] sm:$0xff]
    %v119 = vld [vmem:[#allocation3 + $0x270] sm:$0xff]
    %v120 = vld [vmem:[#allocation3 + $0x278] sm:$0xff]
    %v121 = vld [vmem:[#allocation3 + $0x280] sm:$0xff]
    %v122 = vld [vmem:[#allocation3 + $0x288] sm:$0xff]
    %v123 = vld [vmem:[#allocation3 + $0x290] sm:$0xff]
    %v124 = vld [vmem:[#allocation3 + $0x298] sm:$0xff]
    %v125 = vld [vmem:[#allocation3 + $0x2a0] sm:$0xff]
    %v126 = vld [vmem:[#allocation3 + $0x2a8] sm:$0xff]
    %v127 = vld [vmem:[#allocation3 + $0x2b0] sm:$0xff]
    %v128 = vld [vmem:[#allocation3 + $0x2b8] sm:$0xff]
    %v129 = vld [vmem:[#allocation3 + $0x2c0] sm:$0xff]
    %v130 = vld [vmem:[#allocation3 + $0x2c8] sm:$0xff]
    %v131 = vld [vmem:[#allocation3 + $0x2d0] sm:$0xff]
    %v132 = vld [vmem:[#allocation3 + $0x2d8] sm:$0xff]
    %v133 = vld [vmem:[#allocation3 + $0x2e0] sm:$0xff]
    %v134 = vld [vmem:[#allocation3 + $0x2e8] sm:$0xff]
    %v135 = vld [vmem:[#allocation3 + $0x2f0] sm:$0xff]
    %v136 = vld [vmem:[#allocation3 + $0x2f8] sm:$0xff]
    %v137 = vld [vmem:[#allocation3 + $0x300] sm:$0xff]
    %v138 = vld [vmem:[#allocation3 + $0x308] sm:$0xff]
    %v139 = vld [vmem:[#allocation3 + $0x310] sm:$0xff]
    %v140 = vld [vmem:[#allocation3 + $0x318] sm:$0xff]
    %v141 = vld [vmem:[#allocation3 + $0x320] sm:$0xff]
    %v142 = vld [vmem:[#allocation3 + $0x328] sm:$0xff]
    %v143 = vld [vmem:[#allocation3 + $0x330] sm:$0xff]
    %v144 = vld [vmem:[#allocation3 + $0x338] sm:$0xff]
    %v145 = vld [vmem:[#allocation3 + $0x340] sm:$0xff]
    %v146 = vld [vmem:[#allocation3 + $0x348] sm:$0xff]
    %v147 = vld [vmem:[#allocation3 + $0x350] sm:$0xff]
    %v148 = vld [vmem:[#allocation3 + $0x358] sm:$0xff]
    %v149 = vld [vmem:[#allocation3 + $0x360] sm:$0xff]
    %v150 = vld [vmem:[#allocation3 + $0x368] sm:$0xff]
    %v151 = vld [vmem:[#allocation3 + $0x370] sm:$0xff]
    %v152 = vld [vmem:[#allocation3 + $0x378] sm:$0xff]
    %v153 = vld [vmem:[#allocation3 + $0x380] sm:$0xff]
    %v154 = vld [vmem:[#allocation3 + $0x388] sm:$0xff]
    %v155 = vld [vmem:[#allocation3 + $0x390] sm:$0xff]
    %v156 = vld [vmem:[#allocation3 + $0x398] sm:$0xff]
    %v157 = vld [vmem:[#allocation3 + $0x3a0] sm:$0xff]
    %v158 = vld [vmem:[#allocation3 + $0x3a8] sm:$0xff]
    %v159 = vld [vmem:[#allocation3 + $0x3b0] sm:$0xff]
    %v160 = vld [vmem:[#allocation3 + $0x3b8] sm:$0xff]
    %v161 = vld [vmem:[#allocation3 + $0x3c0] sm:$0xff]
    %v162 = vld [vmem:[#allocation3 + $0x3c8] sm:$0xff]
    %v163 = vld [vmem:[#allocation3 + $0x3d0] sm:$0xff]
    %v164 = vld [vmem:[#allocation3 + $0x3d8] sm:$0xff]
    %v165 = vld [vmem:[#allocation3 + $0x3e0] sm:$0xff]
    %v166 = vld [vmem:[#allocation3 + $0x3e8] sm:$0xff]
    %v167 = vld [vmem:[#allocation3 + $0x3f0] sm:$0xff]
    %v168 = vld [vmem:[#allocation3 + $0x3f8] sm:$0xff]
    %v169 = vld [vmem:[#allocation3 + $0x400] sm:$0xff]
    %v170 = vld [vmem:[#allocation3 + $0x408] sm:$0xff]
    %v171 = vld [vmem:[#allocation3 + $0x410] sm:$0xff]
    %v172 = vld [vmem:[#allocation3 + $0x418] sm:$0xff]
    %v173 = vld [vmem:[#allocation3 + $0x420] sm:$0xff]
    %v174 = vld [vmem:[#allocation3 + $0x428] sm:$0xff]
    %v175 = vld [vmem:[#allocation3 + $0x430] sm:$0xff]
    %v176 = vld [vmem:[#allocation3 + $0x438] sm:$0xff]
    %v177 = vld [vmem:[#allocation3 + $0x440] sm:$0xff]
    %v178 = vld [vmem:[#allocation3 + $0x448] sm:$0xff]
    %v179 = vld [vmem:[#allocation3 + $0x450] sm:$0xff]
    %v180 = vld [vmem:[#allocation3 + $0x458] sm:$0xff]
    %v181 = vld [vmem:[#allocation3 + $0x460] sm:$0xff]
    %v182 = vld [vmem:[#allocation3 + $0x468] sm:$0xff]
    %v183 = vld [vmem:[#allocation3 + $0x470] sm:$0xff]
    %v184 = vld [vmem:[#allocation3 + $0x478] sm:$0xff]
    %v185 = vld [vmem:[#allocation3 + $0x480] sm:$0xff]
    %v186 = vld [vmem:[#allocation3 + $0x488] sm:$0xff]
    %v187 = vld [vmem:[#allocation3 + $0x490] sm:$0xff]
    %v188 = vld [vmem:[#allocation3 + $0x498] sm:$0xff]
    %v189 = vld [vmem:[#allocation3 + $0x4a0] sm:$0xff]
    %v190 = vld [vmem:[#allocation3 + $0x4a8] sm:$0xff]
    %v191 = vld [vmem:[#allocation3 + $0x4b0] sm:$0xff]
    %v192 = vld [vmem:[#allocation3 + $0x4b8] sm:$0xff]
    %v193 = vld [vmem:[#allocation3 + $0x4c0] sm:$0xff]
    %v194 = vld [vmem:[#allocation3 + $0x4c8] sm:$0xff]
    %v195 = vld [vmem:[#allocation3 + $0x4d0] sm:$0xff]
    %v196 = vld [vmem:[#allocation3 + $0x4d8] sm:$0xff]
    %v197 = vld [vmem:[#allocation3 + $0x4e0] sm:$0xff]
    %v198 = vld [vmem:[#allocation3 + $0x4e8] sm:$0xff]
    %v199 = vld [vmem:[#allocation3 + $0x4f0] sm:$0xff]
    %v200 = vld [vmem:[#allocation3 + $0x4f8] sm:$0xff]
    %v201 = vadd.f32 %v41, %v51
    %v202 = vadd.f32 %v201, %v61
    %v203 = vadd.f32 %v202, %v71
    %v204 = vadd.f32 %v203, %v81
    %v205 = vadd.f32 %v204, %v91
    %v206 = vadd.f32 %v205, %v101
    %v207 = vadd.f32 %v206, %v111
    %v208 = vrot.slane %v207, 4
    %v209 = vadd.f32 %v207, %v208
    %v210 = vrot.slane %v209, 2
    %v211 = vadd.f32 %v209, %v210
    %v212 = vrot.slane %v211, 1
    %v213 = vadd.f32 %v211, %v212
    %v214 = vadd.f32 %v42, %v52
    %v215 = vadd.f32 %v214, %v62
    %v216 = vadd.f32 %v215, %v72
    %v217 = vadd.f32 %v216, %v82
    %v218 = vadd.f32 %v217, %v92
    %v219 = vadd.f32 %v218, %v102
    %v220 = vadd.f32 %v219, %v112
    %v221 = vrot.slane %v220, 4
    %v222 = vadd.f32 %v220, %v221
    %v223 = vrot.slane %v222, 2
    %v224 = vadd.f32 %v222, %v223
    %v225 = vrot.slane %v224, 1
    %v226 = vadd.f32 %v224, %v225
    %v227 = vadd.f32 %v43, %v53
    %v228 = vadd.f32 %v227, %v63
    %v229 = vadd.f32 %v228, %v73
    %v230 = vadd.f32 %v229, %v83
    %v231 = vadd.f32 %v230, %v93
    %v232 = vadd.f32 %v231, %v103
    %v233 = vadd.f32 %v232, %v113
    %v234 = vrot.slane %v233, 4
    %v235 = vadd.f32 %v233, %v234
    %v236 = vrot.slane %v235, 2
    %v237 = vadd.f32 %v235, %v236
    %v238 = vrot.slane %v237, 1
    %v239 = vadd.f32 %v237, %v238
    %v240 = vadd.f32 %v44, %v54
    %v241 = vadd.f32 %v240, %v64
    %v242 = vadd.f32 %v241, %v74
    %v243 = vadd.f32 %v242, %v84
    %v244 = vadd.f32 %v243, %v94
    %v245 = vadd.f32 %v244, %v104
    %v246 = vadd.f32 %v245, %v114
    %v247 = vrot.slane %v246, 4
    %v248 = vadd.f32 %v246, %v247
    %v249 = vrot.slane %v248, 2
    %v250 = vadd.f32 %v248, %v249
    %v251 = vrot.slane %v250, 1
    %v252 = vadd.f32 %v250, %v251
    %v253 = vadd.f32 %v45, %v55
    %v254 = vadd.f32 %v253, %v65
    %v255 = vadd.f32 %v254, %v75
    %v256 = vadd.f32 %v255, %v85
    %v257 = vadd.f32 %v256, %v95
    %v258 = vadd.f32 %v257, %v105
    %v259 = vadd.f32 %v258, %v115
    %v260 = vrot.slane %v259, 4
    %v261 = vadd.f32 %v259, %v260
    %v262 = vrot.slane %v261, 2
    %v263 = vadd.f32 %v261, %v262
    %v264 = vrot.slane %v263, 1
    %v265 = vadd.f32 %v263, %v264
    %v266 = vadd.f32 %v46, %v56
    %v267 = vadd.f32 %v266, %v66
    %v268 = vadd.f32 %v267, %v76
    %v269 = vadd.f32 %v268, %v86
    %v270 = vadd.f32 %v269, %v96
    %v271 = vadd.f32 %v270, %v106
    %v272 = vadd.f32 %v271, %v116
    %v273 = vrot.slane %v272, 4
    %v274 = vadd.f32 %v272, %v273
    %v275 = vrot.slane %v274, 2
    %v276 = vadd.f32 %v274, %v275
    %v277 = vrot.slane %v276, 1
    %v278 = vadd.f32 %v276, %v277
    %v279 = vadd.f32 %v47, %v57
    %v280 = vadd.f32 %v279, %v67
    %v281 = vadd.f32 %v280, %v77
    %v282 = vadd.f32 %v281, %v87
    %v283 = vadd.f32 %v282, %v97
    %v284 = vadd.f32 %v283, %v107
    %v285 = vadd.f32 %v284, %v117
    %v286 = vrot.slane %v285, 4
    %v287 = vadd.f32 %v285, %v286
    %v288 = vrot.slane %v287, 2
    %v289 = vadd.f32 %v287, %v288
    %v290 = vrot.slane %v289, 1
    %v291 = vadd.f32 %v289, %v290
    %v292 = vadd.f32 %v48, %v58
    %v293 = vadd.f32 %v292, %v68
    %v294 = vadd.f32 %v293, %v78
    %v295 = vadd.f32 %v294, %v88
    %v296 = vadd.f32 %v295, %v98
    %v297 = vadd.f32 %v296, %v108
    %v298 = vadd.f32 %v297, %v118
    %v299 = vrot.slane %v298, 4
    %v300 = vadd.f32 %v298, %v299
    %v301 = vrot.slane %v300, 2
    %v302 = vadd.f32 %v300, %v301
    %v303 = vrot.slane %v302, 1
    %v304 = vadd.f32 %v302, %v303
    %v305 = vadd.f32 %v49, %v59
    %v306 = vadd.f32 %v305, %v69
    %v307 = vadd.f32 %v306, %v79
    %v308 = vadd.f32 %v307, %v89
    %v309 = vadd.f32 %v308, %v99
    %v310 = vadd.f32 %v309, %v109
    %v311 = vadd.f32 %v310, %v119
    %v312 = vrot.slane %v311, 4
    %v313 = vadd.f32 %v311, %v312
    %v314 = vrot.slane %v313, 2
    %v315 = vadd.f32 %v313, %v314
    %v316 = vrot.slane %v315, 1
    %v317 = vadd.f32 %v315, %v316
    %v318 = vadd.f32 %v50, %v60
    %v319 = vadd.f32 %v318, %v70
    %v320 = vadd.f32 %v319, %v80
    %v321 = vadd.f32 %v320, %v90
    %v322 = vadd.f32 %v321, %v100
    %v323 = vadd.f32 %v322, %v110
    %v324 = vadd.f32 %v323, %v120
    %v325 = vrot.slane %v324, 4
    %v326 = vadd.f32 %v324, %v325
    %v327 = vrot.slane %v326, 2
    %v328 = vadd.f32 %v326, %v327
    %v329 = vrot.slane %v328, 1
    %v330 = vadd.f32 %v328, %v329
    %v331 = vadd.f32 %v121, %v131
    %v332 = vadd.f32 %v331, %v141
    %v333 = vadd.f32 %v332, %v151
    %v334 = vadd.f32 %v333, %v161
    %v335 = vadd.f32 %v334, %v171
    %v336 = vadd.f32 %v335, %v181
    %v337 = vadd.f32 %v336, %v191
    %v338 = vrot.slane %v337, 4
    %v339 = vadd.f32 %v337, %v338
    %v340 = vrot.slane %v339, 2
    %v341 = vadd.f32 %v339, %v340
    %v342 = vrot.slane %v341, 1
    %v343 = vadd.f32 %v341, %v342
    %v344 = vadd.f32 %v122, %v132
    %v345 = vadd.f32 %v344, %v142
    %v346 = vadd.f32 %v345, %v152
    %v347 = vadd.f32 %v346, %v162
    %v348 = vadd.f32 %v347, %v172
    %v349 = vadd.f32 %v348, %v182
    %v350 = vadd.f32 %v349, %v192
    %v351 = vrot.slane %v350, 4
    %v352 = vadd.f32 %v350, %v351
    %v353 = vrot.slane %v352, 2
    %v354 = vadd.f32 %v352, %v353
    %v355 = vrot.slane %v354, 1
    %v356 = vadd.f32 %v354, %v355
    %v357 = vadd.f32 %v123, %v133
    %v358 = vadd.f32 %v357, %v143
    %v359 = vadd.f32 %v358, %v153
    %v360 = vadd.f32 %v359, %v163
    %v361 = vadd.f32 %v360, %v173
    %v362 = vadd.f32 %v361, %v183
    %v363 = vadd.f32 %v362, %v193
    %v364 = vrot.slane %v363, 4
    %v365 = vadd.f32 %v363, %v364
    %v366 = vrot.slane %v365, 2
    %v367 = vadd.f32 %v365, %v366
    %v368 = vrot.slane %v367, 1
    %v369 = vadd.f32 %v367, %v368
    %v370 = vadd.f32 %v124, %v134
    %v371 = vadd.f32 %v370, %v144
    %v372 = vadd.f32 %v371, %v154
    %v373 = vadd.f32 %v372, %v164
    %v374 = vadd.f32 %v373, %v174
    %v375 = vadd.f32 %v374, %v184
    %v376 = vadd.f32 %v375, %v194
    %v377 = vrot.slane %v376, 4
    %v378 = vadd.f32 %v376, %v377
    %v379 = vrot.slane %v378, 2
    %v380 = vadd.f32 %v378, %v379
    %v381 = vrot.slane %v380, 1
    %v382 = vadd.f32 %v380, %v381
    %v383 = vadd.f32 %v125, %v135
    %v384 = vadd.f32 %v383, %v145
    %v385 = vadd.f32 %v384, %v155
    %v386 = vadd.f32 %v385, %v165
    %v387 = vadd.f32 %v386, %v175
    %v388 = vadd.f32 %v387, %v185
    %v389 = vadd.f32 %v388, %v195
    %v390 = vrot.slane %v389, 4
    %v391 = vadd.f32 %v389, %v390
    %v392 = vrot.slane %v391, 2
    %v393 = vadd.f32 %v391, %v392
    %v394 = vrot.slane %v393, 1
    %v395 = vadd.f32 %v393, %v394
    %v396 = vadd.f32 %v126, %v136
    %v397 = vadd.f32 %v396, %v146
    %v398 = vadd.f32 %v397, %v156
    %v399 = vadd.f32 %v398, %v166
    %v400 = vadd.f32 %v399, %v176
    %v401 = vadd.f32 %v400, %v186
    %v402 = vadd.f32 %v401, %v196
    %v403 = vrot.slane %v402, 4
    %v404 = vadd.f32 %v402, %v403
    %v405 = vrot.slane %v404, 2
    %v406 = vadd.f32 %v404, %v405
    %v407 = vrot.slane %v406, 1
    %v408 = vadd.f32 %v406, %v407
    %v409 = vadd.f32 %v127, %v137
    %v410 = vadd.f32 %v409, %v147
    %v411 = vadd.f32 %v410, %v157
    %v412 = vadd.f32 %v411, %v167
    %v413 = vadd.f32 %v412, %v177
    %v414 = vadd.f32 %v413, %v187
    %v415 = vadd.f32 %v414, %v197
    %v416 = vrot.slane %v415, 4
    %v417 = vadd.f32 %v415, %v416
    %v418 = vrot.slane %v417, 2
    %v419 = vadd.f32 %v417, %v418
    %v420 = vrot.slane %v419, 1
    %v421 = vadd.f32 %v419, %v420
    %v422 = vadd.f32 %v128, %v138
    %v423 = vadd.f32 %v422, %v148
    %v424 = vadd.f32 %v423, %v158
    %v425 = vadd.f32 %v424, %v168
    %v426 = vadd.f32 %v425, %v178
    %v427 = vadd.f32 %v426, %v188
    %v428 = vadd.f32 %v427, %v198
    %v429 = vrot.slane %v428, 4
    %v430 = vadd.f32 %v428, %v429
    %v431 = vrot.slane %v430, 2
    %v432 = vadd.f32 %v430, %v431
    %v433 = vrot.slane %v432, 1
    %v434 = vadd.f32 %v432, %v433
    %v435 = vadd.f32 %v129, %v139
    %v436 = vadd.f32 %v435, %v149
    %v437 = vadd.f32 %v436, %v159
    %v438 = vadd.f32 %v437, %v169
    %v439 = vadd.f32 %v438, %v179
    %v440 = vadd.f32 %v439, %v189
    %v441 = vadd.f32 %v440, %v199
    %v442 = vrot.slane %v441, 4
    %v443 = vadd.f32 %v441, %v442
    %v444 = vrot.slane %v443, 2
    %v445 = vadd.f32 %v443, %v444
    %v446 = vrot.slane %v445, 1
    %v447 = vadd.f32 %v445, %v446
    %v448 = vadd.f32 %v130, %v140
    %v449 = vadd.f32 %v448, %v150
    %v450 = vadd.f32 %v449, %v160
    %v451 = vadd.f32 %v450, %v170
    %v452 = vadd.f32 %v451, %v180
    %v453 = vadd.f32 %v452, %v190
    %v454 = vadd.f32 %v453, %v200
    %v455 = vrot.slane %v454, 4
    %v456 = vadd.f32 %v454, %v455
    %v457 = vrot.slane %v456, 2
    %v458 = vadd.f32 %v456, %v457
    %v459 = vrot.slane %v458, 1
    %v460 = vadd.f32 %v458, %v459
    %v461 = vrcp.pop 64.0
    %v462 = vmul.f32 %v213, %v461
    %v463 = vmul.f32 %v226, %v461
    %v464 = vmul.f32 %v239, %v461
    %v465 = vmul.f32 %v252, %v461
    %v466 = vmul.f32 %v265, %v461
    %v467 = vmul.f32 %v278, %v461
    %v468 = vmul.f32 %v291, %v461
    %v469 = vmul.f32 %v304, %v461
    %v470 = vmul.f32 %v317, %v461
    %v471 = vmul.f32 %v330, %v461
    %v472 = vmul.f32 %v343, %v461
    %v473 = vmul.f32 %v356, %v461
    %v474 = vmul.f32 %v369, %v461
    %v475 = vmul.f32 %v382, %v461
    %v476 = vmul.f32 %v395, %v461
    %v477 = vmul.f32 %v408, %v461
    %v478 = vmul.f32 %v421, %v461
    %v479 = vmul.f32 %v434, %v461
    %v480 = vmul.f32 %v447, %v461
    %v481 = vmul.f32 %v460, %v461
    %v482 = vld [vmem:[#allocation5] sm:$0xff]
    %v483 = vld [vmem:[#allocation5 + $0x8] sm:$0x3]
    %v486 = vlaneseq
    %v487 = vshrl.u32 %v486, 7
    %v488 = vsub.s32 0, %v487
    %v489 = vrot.slane %v482, %v488
    %v490 = vlaneseq
    %v491 = vshrl.u32 %v490, 7
    %v492 = vsub.s32 1, %v491
    %v493 = vrot.slane %v482, %v492
    %v494 = vlaneseq
    %v495 = vshrl.u32 %v494, 7
    %v496 = vsub.s32 2, %v495
    %v497 = vrot.slane %v482, %v496
    %v498 = vlaneseq
    %v499 = vshrl.u32 %v498, 7
    %v500 = vsub.s32 3, %v499
    %v501 = vrot.slane %v482, %v500
    %v502 = vlaneseq
    %v503 = vshrl.u32 %v502, 7
    %v504 = vsub.s32 4, %v503
    %v505 = vrot.slane %v482, %v504
    %v506 = vlaneseq
    %v507 = vshrl.u32 %v506, 7
    %v508 = vsub.s32 5, %v507
    %v509 = vrot.slane %v482, %v508
    %v510 = vlaneseq
    %v511 = vshrl.u32 %v510, 7
    %v512 = vsub.s32 6, %v511
    %v513 = vrot.slane %v482, %v512
    %v514 = vlaneseq
    %v515 = vshrl.u32 %v514, 7
    %v516 = vsub.s32 7, %v515
    %v517 = vrot.slane %v482, %v516
    %v518 = vlaneseq
    %v519 = vshrl.u32 %v518, 7
    %v520 = vsub.s32 0, %v519
    %v521 = vrot.slane %v483, %v520
    %v522 = vlaneseq
    %v523 = vshrl.u32 %v522, 7
    %v524 = vsub.s32 1, %v523
    %v525 = vrot.slane %v483, %v524
    %v536 = vmul.f32 %v462, %v489
    %v537 = vmul.f32 %v463, %v493
    %v538 = vmul.f32 %v464, %v497
    %v539 = vmul.f32 %v465, %v501
    %v540 = vmul.f32 %v466, %v505
    %v541 = vmul.f32 %v467, %v509
    %v542 = vmul.f32 %v468, %v513
    %v543 = vmul.f32 %v469, %v517
    %v544 = vmul.f32 %v470, %v521
    %v545 = vmul.f32 %v471, %v525
    %v546 = vmul.f32 %v472, %v489
    %v547 = vmul.f32 %v473, %v493
    %v548 = vmul.f32 %v474, %v497
    %v549 = vmul.f32 %v475, %v501
    %v550 = vmul.f32 %v476, %v505
    %v551 = vmul.f32 %v477, %v509
    %v552 = vmul.f32 %v478, %v513
    %v553 = vmul.f32 %v479, %v517
    %v554 = vmul.f32 %v480, %v521
    %v555 = vmul.f32 %v481, %v525
    %v576 = vrot.slane %v546, 7
    %vm577 = vcmask 1041409
    %v578 = vsel %vm577, %v576, %v536
    %v579 = vrot.slane %v547, 7
    %v580 = vsel %vm577, %v579, %v537
    %v581 = vrot.slane %v548, 7
    %v582 = vsel %vm577, %v581, %v538
    %v583 = vrot.slane %v549, 7
    %v584 = vsel %vm577, %v583, %v539
    %v585 = vrot.slane %v550, 7
    %v586 = vsel %vm577, %v585, %v540
    %v587 = vrot.slane %v551, 7
    %v588 = vsel %vm577, %v587, %v541
    %v589 = vrot.slane %v552, 7
    %v590 = vsel %vm577, %v589, %v542
    %v591 = vrot.slane %v553, 7
    %v592 = vsel %vm577, %v591, %v543
    %v593 = vrot.slane %v554, 7
    %v594 = vsel %vm577, %v593, %v544
    %v595 = vrot.slane %v555, 7
    %v596 = vsel %vm577, %v595, %v545
    %vm607 = vcmask 1041408
    %v608 = vsel %vm607, %v578, 0.0
    %v609 = vsel %vm607, %v580, 0.0
    %v610 = vadd.f32 %v608, %v609
    %v611 = vsel %vm607, %v582, 0.0
    %v612 = vadd.f32 %v610, %v611
    %v613 = vsel %vm607, %v584, 0.0
    %v614 = vadd.f32 %v612, %v613
    %v615 = vsel %vm607, %v586, 0.0
    %v616 = vadd.f32 %v614, %v615
    %v617 = vsel %vm607, %v588, 0.0
    %v618 = vadd.f32 %v616, %v617
    %v619 = vsel %vm607, %v590, 0.0
    %v620 = vadd.f32 %v618, %v619
    %v621 = vsel %vm607, %v592, 0.0
    %v622 = vadd.f32 %v620, %v621
    %v623 = vsel %vm607, %v594, 0.0
    %v624 = vadd.f32 %v622, %v623
    %v625 = vsel %vm607, %v596, 0.0
    %v626 = vadd.f32 %v624, %v625
    %627 = vadd.xlane.f32.xlu0 %v626
    %v628 = vpop.xlane.xlu0 %627
    %s629 = sld [smem:[#allocation2]]
    %v630 = vstv %s629
    %v631 = vadd.f32 %v628, %v630
    %vm632 = vcmask 1024
    %633 = vst.msk [vmem:[%s3] sm:$0x3] %vm632, %v631
    // Predicated region
    $region22: #{tpu_custom_call.1} parent=1 // pred_check
      _
    $region23: #{tpu_custom_call.1} parent=1 // pred_check_branch
      %635 = sbr.rel (0) target = $region25
    $region24: #{tpu_custom_call.1} parent=1 // pred_region
      _
    $region25: #{tpu_custom_call.1} parent=1 // pred_fallthru
      _
    // Predicated region
    $region26: #{tpu_custom_call.1} parent=1 // pred_check
      _
    $region27: #{tpu_custom_call.1} parent=1 // pred_check_branch
      %637 = sbr.rel (0) target = $region29
    $region28: #{tpu_custom_call.1} parent=1 // pred_region
      _
    $region29: #{tpu_custom_call.1} parent=1 // pred_fallthru
      _
    %638 = vsyncpa [#allocation4], 1
    %639 = vsyncpa [#allocation6], 1

</llo_original>
